<compile_context>
chip_gen: v5e
topology: v5e:2x2
jax: 0.10.0
libtpu: 0.0.40
codegen_flags: <defaults>
</compile_context>

<pallas_src>
import jax
import jax.numpy as jnp
from jax.experimental import pallas as pl
from jax.experimental.pallas import tpu as pltpu


def _cdiv(a, b):
    return (a + b - 1) // b


def _round_up(a, b):
    return (a + b - 1) // b * b


def _vmem_capacity_bytes():
    try:
        return int(pltpu.get_tpu_info().vmem_capacity_bytes)
    except Exception:
        return 64 * 1024 * 1024          # conservative default (v7x per-TC)


def _make_maxpool_kernel(n_total, tn, fill):
    """Kernel closure over the static sequence length, N tile and fill value."""
    needs_mask = (n_total % tn) != 0

    def kernel(x_ref, val_ref, idx_ref, acc_val_ref, acc_idx_ref):
        k = pl.program_id(2)              # reduction (N-chunk) axis, last in grid
        nk = pl.num_programs(2)
        acc_dtype = acc_val_ref.dtype
        is_float = jnp.issubdtype(acc_dtype, jnp.floating)

        @pl.when(k == 0)
        def _init():
            acc_val_ref[...] = jnp.full(acc_val_ref.shape, fill, acc_dtype)
            acc_idx_ref[...] = jnp.zeros(acc_idx_ref.shape, jnp.int32)

        x = x_ref[...]                                          # (TB, tn, TD) native dtype
        iota = jax.lax.broadcasted_iota(jnp.int32, x.shape, 1)  # per-tile n index

        if needs_mask:
            # Mask the N tail (garbage rows in the last chunk).  Garbage in
            # B/D tails only reaches output rows/lanes that Pallas discards.
            row_limit = n_total - k * tn                        # scalar
            x = jnp.where(iota < row_limit, x, jnp.array(fill, x.dtype))

        chunk_max = jnp.max(x, axis=1)                          # (TB, TD)

        # first-occurrence argmax within this chunk (per-tile iota only)
        hit = x == chunk_max[:, None, :]
        if is_float:
            # propagate NaN like torch.max: first NaN wins and keeps its index
            hit = jnp.logical_or(hit, jnp.isnan(x))
        chunk_idx = k * tn + jnp.min(
            jnp.where(hit, iota, jnp.int32(tn)), axis=1)        # (TB, TD) global idx

        cur_val = acc_val_ref[...]
        cur_idx = acc_idx_ref[...]
        better = chunk_max > cur_val        # strict '>': earlier chunk wins ties
        if is_float:
            better = jnp.logical_or(
                better,
                jnp.logical_and(jnp.isnan(chunk_max),
                                jnp.logical_not(jnp.isnan(cur_val))),
            )
        acc_val_ref[...] = jnp.where(better, chunk_max, cur_val)
        acc_idx_ref[...] = jnp.where(better, chunk_idx, cur_idx)

        @pl.when(k == nk - 1)
        def _finalize():
            val_ref[...] = acc_val_ref[...].astype(val_ref.dtype)
            idx_ref[...] = acc_idx_ref[...]

    return kernel


def max_pooling(x, *, n_tile=None):
    """Equivalent of torch.max(x, dim=1) -> (values, indices) for x: [B, N, D]."""
    B, N, D = x.shape
    itemsize = jnp.dtype(x.dtype).itemsize

    if jnp.issubdtype(x.dtype, jnp.floating):
        if itemsize > 4:
            raise TypeError("float64 inputs are not supported (use float32)")
        fill = float("-inf")
        acc_dtype = x.dtype                 # max is exact in the native dtype
    elif jnp.issubdtype(x.dtype, jnp.integer):
        if itemsize > 4:
            raise TypeError("int64 inputs are not supported (use int32)")
        fill = int(jnp.iinfo(x.dtype).min)
        acc_dtype = x.dtype
    else:
        raise TypeError(f"unsupported dtype {x.dtype}")

    # ---- generation-aware sizing --------------------------------------------
    vmem_cap = _vmem_capacity_bytes()
    if vmem_cap >= 96 * 1024 * 1024:        # v5e / v6e: 128 MiB VMEM
        tile_bytes = 8 << 20
        vmem_limit = 64 * 1024 * 1024
    else:                                   # v7x: 64 MiB per TensorCore
        tile_bytes = 4 << 20
        vmem_limit = 32 * 1024 * 1024

    # ---- tile sizing (cdiv grids, no host padding) ---------------------------
    TB = 8 if B >= 8 else B                  # full-sublane output rows when possible
    if D >= 128:
        TD = min(512, (D // 128) * 128)      # lane-dense, long contiguous DMA rows
    else:
        TD = D                               # small D: block == full dim
    grid_b = _cdiv(B, TB)
    grid_d = _cdiv(D, TD)
    # megacore (v7x): make sure the parallel (b, d) grid has >= 2 tiles if possible
    if grid_b == 1 and grid_d == 1 and D >= 256:
        TD = _round_up(_cdiv(D, 2), 128)
        grid_d = _cdiv(D, TD)

    pack = 8 * max(1, 4 // itemsize)         # native sublane tile: 8 f32/16 bf16/32 i8
    if N < 8:
        tn = N                               # full-dim block (allowed)
    elif n_tile is not None:
        tn = min(max(8, _round_up(int(n_tile), 8)), _round_up(N, 8))
    else:
        tn = tile_bytes // (TB * TD * itemsize)
        tn = max(pack, (tn // pack) * pack)
        tn = min(tn, _round_up(N, pack))
    grid_n = _cdiv(N, tn)

    grid = (grid_b, grid_d, grid_n)

    cost = pl.CostEstimate(
        flops=5 * B * N * D,
        transcendentals=0,
        bytes_accessed=B * N * D * itemsize + B * D * (itemsize + 4),
    )

    kernel = _make_maxpool_kernel(N, tn, fill)

    vals, idx = pl.pallas_call(
        kernel,
        out_shape=(
            jax.ShapeDtypeStruct((B, D), x.dtype),
            jax.ShapeDtypeStruct((B, D), jnp.int32),
        ),
        grid_spec=pltpu.PrefetchScalarGridSpec(
            num_scalar_prefetch=0,
            grid=grid,
            in_specs=[pl.BlockSpec((TB, tn, TD), lambda b, d, k: (b, k, d))],
            out_specs=(
                pl.BlockSpec((TB, TD), lambda b, d, k: (b, d)),
                pl.BlockSpec((TB, TD), lambda b, d, k: (b, d)),
            ),
            scratch_shapes=[
                pltpu.VMEM((TB, TD), acc_dtype),   # running max
                pltpu.VMEM((TB, TD), jnp.int32),   # running argmax
            ],
        ),
        compiler_params=pltpu.CompilerParams(
            dimension_semantics=("parallel", "parallel", "arbitrary"),
            vmem_limit_bytes=vmem_limit,
        ),
        cost_estimate=cost,
    )(x)

    return vals, idx


if __name__ == "__main__":
    key0, key1, key2 = jax.random.split(jax.random.PRNGKey(0), 3)

    # shapes implied by the module's forward (torch.max(x, dim=1)): [B, N, D]
    B, N, D = 2, 8, 32
    x = jax.random.normal(key0, (B, N, D), dtype=jnp.float32)
    values, indices = max_pooling(x)
    jax.block_until_ready((values, indices))
    assert values.shape == (B, D) and indices.shape == (B, D)
    assert jnp.allclose(values, jnp.max(x, axis=1))
    assert jnp.all(indices == jnp.argmax(x, axis=1).astype(jnp.int32))

    # unaligned B/N/D + multi-step N reduction (exercises the in-kernel N mask)
    B2, N2, D2 = 3, 41, 70
    x2 = jax.random.normal(key1, (B2, N2, D2), dtype=jnp.float32)
    v2, i2 = max_pooling(x2, n_tile=16)   # 3 reduction steps, 41 % 16 != 0
    jax.block_until_ready((v2, i2))
    assert jnp.allclose(v2, jnp.max(x2, axis=1))
    assert jnp.all(i2 == jnp.argmax(x2, axis=1).astype(jnp.int32))

    # bf16 native-dtype path + megacore D split + N-tail mask with default tiling
    B3, N3, D3 = 4, 50, 256
    x3 = jax.random.normal(key2, (B3, N3, D3), dtype=jnp.bfloat16)
    v3, i3 = max_pooling(x3)
    jax.block_until_ready((v3, i3))
    assert jnp.all(v3 == jnp.max(x3, axis=1))
    assert jnp.all(i3 == jnp.argmax(x3, axis=1).astype(jnp.int32))

    print("KERNEL_OK")
</pallas_src>

<mosaic_0001>
module attributes {stable_mosaic.version = 11 : i64} {
  func.func @kernel(%arg0: i32, %arg1: i32, %arg2: i32, %arg3: memref<2x8x32xf32, #tpu.memory_space<vmem>>, %arg4: memref<2x32xf32, #tpu.memory_space<vmem>>, %arg5: memref<2x32xi32, #tpu.memory_space<vmem>>, %arg6: memref<2x32xf32, #tpu.memory_space<vmem>>, %arg7: memref<2x32xi32, #tpu.memory_space<vmem>>) attributes {dimension_semantics = [#tpu.dimension_semantics<parallel>, #tpu.dimension_semantics<parallel>, #tpu.dimension_semantics<arbitrary>], iteration_bounds = array<i64: 1, 1, 1>, scalar_prefetch = 0 : i64, scratch_operands = 2 : i64, tpu.core_type = #tpu.core_type<tc>, window_params = [{transform_indices = @transform_0, window_bounds = array<i64: 2, 8, 32>}, {transform_indices = @transform_1, window_bounds = array<i64: 2, 32>}, {transform_indices = @transform_2, window_bounds = array<i64: 2, 32>}]} {
    %c0_i32 = arith.constant 0 : i32
    %0 = arith.cmpi eq, %arg2, %c0_i32 : i32
    %1 = arith.extui %0 : i1 to i32
    %c0_i32_0 = arith.constant 0 : i32
    %2 = arith.cmpi ne, %1, %c0_i32_0 : i32
    scf.if %2 {
      %cst_16 = arith.constant 0xFF800000 : f32
      %32 = vector.broadcast %cst_16 : f32 to vector<2x32xf32>
      %c0_17 = arith.constant 0 : index
      %c0_18 = arith.constant 0 : index
      %33 = vector.load %arg6[%c0_17, %c0_18] : memref<2x32xf32, #tpu.memory_space<vmem>>, vector<2x32xf32>
      tpu.vector_store %arg6[%c0_17, %c0_18], %32 {strides = array<i32>} : memref<2x32xf32, #tpu.memory_space<vmem>>, vector<2x32xf32>,
      %c0_i32_19 = arith.constant 0 : i32
      %34 = vector.broadcast %c0_i32_19 : i32 to vector<2x32xi32>
      %c0_20 = arith.constant 0 : index
      %c0_21 = arith.constant 0 : index
      %35 = vector.load %arg7[%c0_20, %c0_21] : memref<2x32xi32, #tpu.memory_space<vmem>>, vector<2x32xi32>
      tpu.vector_store %arg7[%c0_20, %c0_21], %34 {strides = array<i32>} : memref<2x32xi32, #tpu.memory_space<vmem>>, vector<2x32xi32>,
    } else {
    }
    %c0 = arith.constant 0 : index
    %c0_1 = arith.constant 0 : index
    %c0_2 = arith.constant 0 : index
    %3 = vector.load %arg3[%c0, %c0_1, %c0_2] : memref<2x8x32xf32, #tpu.memory_space<vmem>>, vector<2x8x32xf32>
    %4 = tpu.iota {dimensions = array<i32: 1>} : vector<2x8x32xi32>
    %cst = arith.constant dense<0xFF800000> : vector<2x32xf32>
    %5 = vector.multi_reduction <maximumf>, %3, %cst [1] : vector<2x8x32xf32> to vector<2x32xf32>
    %6 = vector.shape_cast %5 : vector<2x32xf32> to vector<2x1x32xf32>
    %7 = vector.broadcast %6 : vector<2x1x32xf32> to vector<2x8x32xf32>
    %8 = arith.cmpf oeq, %3, %7 : vector<2x8x32xf32>
    %9 = arith.cmpf one, %3, %3 : vector<2x8x32xf32>
    %10 = arith.ori %8, %9 : vector<2x8x32xi1>
    %c8_i32 = arith.constant 8 : i32
    %11 = arith.muli %arg2, %c8_i32 : i32
    %c8_i32_3 = arith.constant 8 : i32
    %12 = vector.broadcast %c8_i32_3 : i32 to vector<2x8x32xi32>
    %13 = arith.select %10, %4, %12 : vector<2x8x32xi1>, vector<2x8x32xi32>
    %cst_4 = arith.constant dense<2147483647> : vector<2x32xi32>
    %14 = vector.multi_reduction <minsi>, %13, %cst_4 [1] : vector<2x8x32xi32> to vector<2x32xi32>
    %15 = vector.broadcast %11 : i32 to vector<2x32xi32>
    %16 = arith.addi %15, %14 : vector<2x32xi32>
    %c0_5 = arith.constant 0 : index
    %c0_6 = arith.constant 0 : index
    %17 = vector.load %arg6[%c0_5, %c0_6] : memref<2x32xf32, #tpu.memory_space<vmem>>, vector<2x32xf32>
    %c0_7 = arith.constant 0 : index
    %c0_8 = arith.constant 0 : index
    %18 = vector.load %arg7[%c0_7, %c0_8] : memref<2x32xi32, #tpu.memory_space<vmem>>, vector<2x32xi32>
    %19 = arith.cmpf ogt, %5, %17 : vector<2x32xf32>
    %20 = arith.cmpf one, %5, %5 : vector<2x32xf32>
    %21 = arith.cmpf one, %17, %17 : vector<2x32xf32>
    %cst_9 = arith.constant dense<true> : vector<2x32xi1>
    %22 = arith.xori %21, %cst_9 : vector<2x32xi1>
    %23 = arith.andi %20, %22 : vector<2x32xi1>
    %24 = arith.ori %19, %23 : vector<2x32xi1>
    %25 = arith.select %24, %5, %17 : vector<2x32xi1>, vector<2x32xf32>
    %c0_10 = arith.constant 0 : index
    %c0_11 = arith.constant 0 : index
    %26 = vector.load %arg6[%c0_10, %c0_11] : memref<2x32xf32, #tpu.memory_space<vmem>>, vector<2x32xf32>
    tpu.vector_store %arg6[%c0_10, %c0_11], %25 {strides = array<i32>} : memref<2x32xf32, #tpu.memory_space<vmem>>, vector<2x32xf32>,
    %27 = arith.select %24, %16, %18 : vector<2x32xi1>, vector<2x32xi32>
    %c0_12 = arith.constant 0 : index
    %c0_13 = arith.constant 0 : index
    %28 = vector.load %arg7[%c0_12, %c0_13] : memref<2x32xi32, #tpu.memory_space<vmem>>, vector<2x32xi32>
    tpu.vector_store %arg7[%c0_12, %c0_13], %27 {strides = array<i32>} : memref<2x32xi32, #tpu.memory_space<vmem>>, vector<2x32xi32>,
    %c0_i32_14 = arith.constant 0 : i32
    %29 = arith.cmpi eq, %arg2, %c0_i32_14 : i32
    %30 = arith.extui %29 : i1 to i32
    %c0_i32_15 = arith.constant 0 : i32
    %31 = arith.cmpi ne, %30, %c0_i32_15 : i32
    scf.if %31 {
      %c0_16 = arith.constant 0 : index
      %c0_17 = arith.constant 0 : index
      %32 = vector.load %arg6[%c0_16, %c0_17] : memref<2x32xf32, #tpu.memory_space<vmem>>, vector<2x32xf32>
      %c0_18 = arith.constant 0 : index
      %c0_19 = arith.constant 0 : index
      %33 = vector.load %arg4[%c0_18, %c0_19] : memref<2x32xf32, #tpu.memory_space<vmem>>, vector<2x32xf32>
      tpu.vector_store %arg4[%c0_18, %c0_19], %32 {strides = array<i32>} : memref<2x32xf32, #tpu.memory_space<vmem>>, vector<2x32xf32>,
      %c0_20 = arith.constant 0 : index
      %c0_21 = arith.constant 0 : index
      %34 = vector.load %arg7[%c0_20, %c0_21] : memref<2x32xi32, #tpu.memory_space<vmem>>, vector<2x32xi32>
      %c0_22 = arith.constant 0 : index
      %c0_23 = arith.constant 0 : index
      %35 = vector.load %arg5[%c0_22, %c0_23] : memref<2x32xi32, #tpu.memory_space<vmem>>, vector<2x32xi32>
      tpu.vector_store %arg5[%c0_22, %c0_23], %34 {strides = array<i32>} : memref<2x32xi32, #tpu.memory_space<vmem>>, vector<2x32xi32>,
    } else {
    }
    return
  }
  func.func @transform_0(%arg0: i32, %arg1: i32, %arg2: i32) -> (i32, i32, i32) {
    %c0_i32 = arith.constant 0 : i32
    return %arg0, %arg2, %arg1 : i32, i32, i32
  }
  func.func @transform_1(%arg0: i32, %arg1: i32, %arg2: i32) -> (i32, i32) {
    %c0_i32 = arith.constant 0 : i32
    return %arg0, %arg1 : i32, i32
  }
  func.func @transform_2(%arg0: i32, %arg1: i32, %arg2: i32) -> (i32, i32) {
    %c0_i32 = arith.constant 0 : i32
    return %arg0, %arg1 : i32, i32
  }
}

</mosaic_0001>

<llo_original>
// kernel: tpu_custom_call.1
$region0: #{tpu_custom_call.1}
  #allocation0 [shape = 'u32[]', space=smem, size = 0x4, offset = 0x4, fixed_abs, tag = 'smem constant byte address 0x4 - core index']
  #allocation1 [shape = 'u32[72,128]{1,0:T(1,128)}', space=vmem, size = 0x9000, scoped, tag = 'internal scratch']
  #allocation2 [shape = 'f32[2,32]{1,0:T(2,128)}', space=vmem, size = 0x400, scoped, tag = 'scratch operand']
  #allocation3 [shape = 's32[2,32]{1,0:T(2,128)}', space=vmem, size = 0x400, scoped, tag = 'scratch operand']
  %s0 = inlined_call_operand.hbm [shape: f32[2,8,32], index: 0, kind: input, shape index: {}]
  %s1 = inlined_call_operand.hbm [shape: f32[2,32], index: 1, kind: output, shape index: {0}]
  %s2 = inlined_call_operand.hbm [shape: s32[2,32], index: 2, kind: output, shape index: {1}]
  %3 = xla_tuple %s1, %s2
  %s4 = sld [smem:[#allocation0]]
  $region34: #{tpu_custom_call.1} parent=0
    _
  %s6 = ssub.s32 1, %s4
  %s7 = scalar_select 0, %s6, %s4
  $region1: #{tpu_custom_call.1} parent=0
    #allocation4 [shape = 'u8[8192]{0}', space=vmem, size = 0x2000, scoped, tag = 'input window, operand 0, single buffered']
    #allocation5 [shape = 's32[1]{0}', space=sflag, size = 0x4, scoped, tag = 'scoped memory for tpu_custom_call.1']
    #allocation6 [shape = 's32[1]{0}', space=sflag, size = 0x4, scoped, tag = 'scoped memory for tpu_custom_call.1']
    #allocation7 [shape = 'u8[1024]{0}', space=vmem, size = 0x400, scoped, tag = 'output window, operand 0, single buffered']
    #allocation8 [shape = 'u8[1024]{0}', space=vmem, size = 0x400, scoped, tag = 'output window, operand 1, single buffered']
    #allocation9 [shape = 's32[1]{0}', space=sflag, size = 0x4, scoped, tag = 'scoped memory for tpu_custom_call.1']
    %8 = vsyncpa [#allocation5], 0
    %9 = vsyncpa [#allocation6], 0
    %10 = vsyncpa [#allocation9], 0
    // Predicated region
    $region2: #{tpu_custom_call.1} parent=1 // pred_check
      _
    $region3: #{tpu_custom_call.1} parent=1 // pred_check_branch
      %12 = sbr.rel (0) target = $region5
    $region4: #{tpu_custom_call.1} parent=1 // pred_region
      %14 = vsyncadd [#allocation5], 0
      %s15 = sshll.u32 %s0, 4
      %s16 = int_to_ptr.hbm [resolvable:$true] %s15
      %s17 = sshll.u32 [#allocation4], 4
      %s18 = int_to_ptr.vmem [resolvable:$true] %s17
      %23 = dma.hbm_to_vmem [thread:$0]  %s16, 256, %s18, [#allocation5], 128, 128, 8
    $region5: #{tpu_custom_call.1} parent=1 // pred_fallthru
      _
    // Predicated region
    $region6: #{tpu_custom_call.1} parent=1 // pred_check
      _
    $region7: #{tpu_custom_call.1} parent=1 // pred_check_branch
      %25 = sbr.rel (0) target = $region9
    $region8: #{tpu_custom_call.1} parent=1 // pred_region
      %27 = dma.done [#allocation5], 256
    $region9: #{tpu_custom_call.1} parent=1 // pred_fallthru
      _
    %p28 = scmp.eq.s32.totalorder 0, 0
    // Predicated region
    $region10: #{tpu_custom_call.1} parent=1 // pred_check
      %p29 = pneg %p28
    $region11: #{tpu_custom_call.1} parent=1 // pred_check_branch
      %31 = sbr.rel (%p29) target = $region13
    $region12: #{tpu_custom_call.1} parent=1 // pred_region
      %vm32 = vcmask 254976
      %33 = vst.msk [vmem:[#allocation2] sm:$0x3] %vm32, -inf
      %34 = vst.msk [vmem:[#allocation3] sm:$0x3] %vm32, 0
    $region13: #{tpu_custom_call.1} parent=1 // pred_fallthru
      _
    %v35 = vld [vmem:[#allocation4] sm:$0xff]
    %v36 = vld [vmem:[#allocation4 + $0x8] sm:$0xff]
    %v37 = vlaneseq
    %v38 = vshrl.u32 %v37, 7
    %vm39 = vcmask 261120
    %v40 = vsel %vm39, %v35, -inf
    %v41 = vrot.slane %v40, 4
    %v42 = vmax.f32 %v40, %v41
    %v43 = vrot.slane %v42, 2
    %v44 = vmax.f32 %v42, %v43
    %v45 = vrot.slane %v44, 1
    %v46 = vmax.f32 %v44, %v45
    %v47 = vsel %vm39, %v36, -inf
    %v48 = vrot.slane %v47, 4
    %v49 = vmax.f32 %v47, %v48
    %v50 = vrot.slane %v49, 2
    %v51 = vmax.f32 %v49, %v50
    %v52 = vrot.slane %v51, 1
    %v53 = vmax.f32 %v51, %v52
    %vm54 = vcmp.eq.f32.partialorder %v35, %v46
    %vm55 = vcmp.eq.f32.partialorder %v36, %v53
    %vm56 = vcmp.ne.f32.partialorder %v35, %v35
    %vm57 = vcmp.ne.f32.partialorder %v36, %v36
    %vm58 = vmor %vm54, %vm56
    %vm59 = vmor %vm55, %vm57
    %s60 = smul.u32 0, 8
    %v61 = vsel %vm58, %v38, 8
    %v62 = vsel %vm59, %v38, 8
    %v63 = vsel %vm39, %v61, 2147483647
    %v64 = vrot.slane %v63, 4
    %vm65 = vcmp.lt.s32.totalorder %v63, %v64
    %v66 = vsel %vm65, %v63, %v64
    %v67 = vrot.slane %v66, 2
    %vm68 = vcmp.lt.s32.totalorder %v66, %v67
    %v69 = vsel %vm68, %v66, %v67
    %v70 = vrot.slane %v69, 1
    %vm71 = vcmp.lt.s32.totalorder %v69, %v70
    %v72 = vsel %vm71, %v69, %v70
    %v73 = vsel %vm39, %v62, 2147483647
    %v74 = vrot.slane %v73, 4
    %vm75 = vcmp.lt.s32.totalorder %v73, %v74
    %v76 = vsel %vm75, %v73, %v74
    %v77 = vrot.slane %v76, 2
    %vm78 = vcmp.lt.s32.totalorder %v76, %v77
    %v79 = vsel %vm78, %v76, %v77
    %v80 = vrot.slane %v79, 1
    %vm81 = vcmp.lt.s32.totalorder %v79, %v80
    %v82 = vsel %vm81, %v79, %v80
    %v83 = vstv %s60
    %v84 = vadd.s32 %v83, %v72
    %v85 = vadd.s32 %v83, %v82
    %v86 = vld [vmem:[#allocation2] sm:$0x3]
    %v87 = vld [vmem:[#allocation3] sm:$0x3]
    %v89 = vrot.slane %v86, 1
    %vm92 = vcmp.gt.f32.partialorder %v46, %v86
    %vm93 = vcmp.gt.f32.partialorder %v53, %v89
    %vm94 = vcmp.ne.f32.partialorder %v46, %v46
    %vm95 = vcmp.ne.f32.partialorder %v53, %v53
    %vm96 = vcmp.ne.f32.partialorder %v86, %v86
    %vm97 = vmxor %vm96, 1
    %v98 = vsel %vm97, 1, 0
    %v99 = vrot.slane %v98, 1
    %vm100 = vcmp.ne.s32.totalorder %v98, 0
    %vm101 = vcmp.ne.s32.totalorder %v99, 0
    %vm102 = vmand %vm94, %vm100
    %vm103 = vmand %vm95, %vm101
    %vm104 = vmor %vm92, %vm102
    %vm105 = vmor %vm93, %vm103
    %v106 = vsel %vm104, %v46, %v86
    %v107 = vsel %vm105, %v53, %v89
    %v110 = vrot.slane %v107, 7
    %vm111 = vcmask 1041409
    %v112 = vsel %vm111, %v110, %v106
    %vm114 = vcmask 254976
    %115 = vst.msk [vmem:[#allocation2] sm:$0x3] %vm114, %v112
    %v116 = vrot.slane %v87, 1
    %v117 = vsel %vm104, %v84, %v87
    %v118 = vsel %vm105, %v85, %v116
    %v119 = vrot.slane %v118, 7
    %v120 = vsel %vm111, %v119, %v117
    %121 = vst.msk [vmem:[#allocation3] sm:$0x3] %vm114, %v120
    // Predicated region
    $region14: #{tpu_custom_call.1} parent=1 // pred_check
      %p122 = pneg %p28
    $region15: #{tpu_custom_call.1} parent=1 // pred_check_branch
      %124 = sbr.rel (%p122) target = $region17
    $region16: #{tpu_custom_call.1} parent=1 // pred_region
      %v125 = vld [vmem:[#allocation2] sm:$0x3]
      %126 = vst.msk [vmem:[#allocation7] sm:$0x3] %vm114, %v125
      %v127 = vld [vmem:[#allocation3] sm:$0x3]
      %128 = vst.msk [vmem:[#allocation8] sm:$0x3] %vm114, %v127
    $region17: #{tpu_custom_call.1} parent=1 // pred_fallthru
      _
    // Predicated region
    $region18: #{tpu_custom_call.1} parent=1 // pred_check
      _
    $region19: #{tpu_custom_call.1} parent=1 // pred_check_branch
      %130 = sbr.rel (0) target = $region21
    $region20: #{tpu_custom_call.1} parent=1 // pred_region
      %132 = vsyncadd [#allocation6], 0
      %s134 = sshll.u32 [#allocation7], 4
      %s135 = int_to_ptr.vmem [resolvable:$true] %s134
      %s136 = sshll.u32 %s1, 4
      %s137 = int_to_ptr.hbm [resolvable:$true] %s136
      %139 = dma.vmem_to_hbm [thread:$0]  %s135, 32, %s137, [#allocation6]
    $region21: #{tpu_custom_call.1} parent=1 // pred_fallthru
      _
    // Predicated region
    $region22: #{tpu_custom_call.1} parent=1 // pred_check
      _
    $region23: #{tpu_custom_call.1} parent=1 // pred_check_branch
      %141 = sbr.rel (0) target = $region25
    $region24: #{tpu_custom_call.1} parent=1 // pred_region
      %143 = vsyncadd [#allocation9], 0
      %s145 = sshll.u32 [#allocation8], 4
      %s146 = int_to_ptr.vmem [resolvable:$true] %s145
      %s147 = sshll.u32 %s2, 4
      %s148 = int_to_ptr.hbm [resolvable:$true] %s147
      %150 = dma.vmem_to_hbm [thread:$0]  %s146, 32, %s148, [#allocation9]
    $region25: #{tpu_custom_call.1} parent=1 // pred_fallthru
      _
    // Predicated region
    $region26: #{tpu_custom_call.1} parent=1 // pred_check
      _
    $region27: #{tpu_custom_call.1} parent=1 // pred_check_branch
      %152 = sbr.rel (0) target = $region29
    $region28: #{tpu_custom_call.1} parent=1 // pred_region
      %154 = dma.done [#allocation6], 32
    $region29: #{tpu_custom_call.1} parent=1 // pred_fallthru
      _
    // Predicated region
    $region30: #{tpu_custom_call.1} parent=1 // pred_check
      _
    $region31: #{tpu_custom_call.1} parent=1 // pred_check_branch
      %156 = sbr.rel (0) target = $region33
    $region32: #{tpu_custom_call.1} parent=1 // pred_region
      %158 = dma.done [#allocation9], 32
    $region33: #{tpu_custom_call.1} parent=1 // pred_fallthru
      _
    %159 = vsyncpa [#allocation5], 1
    %160 = vsyncpa [#allocation6], 1
    %161 = vsyncpa [#allocation9], 1

</llo_original>
